<compile_context>
chip_gen: v7x
topology: tpu7x:2x2x1
jax: 0.10.0
libtpu: 0.0.40
codegen_flags: <defaults>
</compile_context>

<pallas_src>
import jax
import jax.numpy as jnp
from jax.experimental import pallas as pl
from jax.experimental.pallas import tpu as pltpu


def _round_up(n, m):
    return ((n + m - 1) // m) * m


# ----------------------------------------------------------------------------
# Parameters (PyTorch layout: W [out, in], b [out])
# ----------------------------------------------------------------------------
def init_params(key, input_dim, latent_dim):
    shapes = {
        "we1": (10, input_dim), "be1": (10,),
        "we2": (5, 10),         "be2": (5,),
        "we3": (latent_dim, 5), "be3": (latent_dim,),
        "wd1": (5, latent_dim), "bd1": (5,),
        "wd2": (10, 5),         "bd2": (10,),
        "wd3": (input_dim, 10), "bd3": (input_dim,),
        "wes1": (10, latent_dim + 1), "bes1": (10,),
        "wes2": (2, 10),              "bes2": (2,),
    }
    keys = jax.random.split(key, len(shapes))
    return {
        n: (0.1 * jax.random.normal(k, s)).astype(jnp.float32)
        for (n, s), k in zip(shapes.items(), keys)
    }


_PARAM_ORDER = [
    "we1", "be1", "we2", "be2", "we3", "be3",
    "wd1", "bd1", "wd2", "bd2", "wd3", "bd3",
    "wes1", "bes1", "wes2", "bes2",
]


def pack_params(params):
    """Pack all weights/biases into one f32 slab; each entry starts on a
    sublane-aligned (multiple-of-8) row.  Returns (slab, offsets) where
    offsets[name] = (row_offset, rows, cols)."""
    mats = {}
    for n in _PARAM_ORDER:
        a = params[n]
        mats[n] = a if a.ndim == 2 else a.reshape(-1, 1)

    ncols = max(m.shape[1] for m in mats.values())
    offsets = {}
    row = 0
    for n in _PARAM_ORDER:
        r, c = mats[n].shape
        offsets[n] = (row, r, c)
        row += _round_up(r, 8)

    slab = jnp.zeros((row, ncols), jnp.float32)
    for n in _PARAM_ORDER:
        off, r, c = offsets[n]
        slab = slab.at[off:off + r, 0:c].set(mats[n])
    return slab, offsets


# ----------------------------------------------------------------------------
# Kernel (transposed layout: everything is (features, TB))
# ----------------------------------------------------------------------------
def make_dagmm_kernel(offsets, latent_dim):
    def kernel(x_ref, w_ref, zc_ref, xhat_ref, rec_ref, gamma_ref):
        def p(name):
            off, r, c = offsets[name]
            return w_ref[off:off + r, 0:c]

        x = x_ref[...]                                              # (in, TB)

        # ----- encoder: Linear(in,10) ReLU Linear(10,5) ReLU Linear(5,latent)
        h = jnp.dot(p("we1"), x, preferred_element_type=jnp.float32) + p("be1")
        h = jnp.maximum(h, 0.0)
        h = jnp.dot(p("we2"), h, preferred_element_type=jnp.float32) + p("be2")
        h = jnp.maximum(h, 0.0)
        z_c = jnp.dot(p("we3"), h, preferred_element_type=jnp.float32) + p("be3")
        zc_ref[...] = z_c                                           # (latent, TB)

        # ----- decoder: Linear(latent,5) ReLU Linear(5,10) ReLU Linear(10,in)
        d = jnp.dot(p("wd1"), z_c, preferred_element_type=jnp.float32) + p("bd1")
        d = jnp.maximum(d, 0.0)
        d = jnp.dot(p("wd2"), d, preferred_element_type=jnp.float32) + p("bd2")
        d = jnp.maximum(d, 0.0)
        x_hat = jnp.dot(p("wd3"), d, preferred_element_type=jnp.float32) + p("bd3")
        xhat_ref[...] = x_hat                                       # (in, TB)

        # ----- reconstruction error: mean over features (sublane axis)
        diff = x - x_hat
        rec = jnp.mean(diff * diff, axis=0, keepdims=True)          # (1, TB)
        rec_ref[...] = rec

        # ----- estimation net on z = [z_c ; rec] (split matmul, exact)
        wes1 = p("wes1")                                            # (10, latent+1)
        eh = (
            jnp.dot(wes1[:, :latent_dim], z_c, preferred_element_type=jnp.float32)
            + wes1[:, latent_dim:latent_dim + 1] * rec              # (10,1)*(1,TB)
            + p("bes1")
        )
        eh = jnp.tanh(eh)
        logits = (
            jnp.dot(p("wes2"), eh, preferred_element_type=jnp.float32) + p("bes2")
        )                                                           # (2, TB)

        # 2-class softmax, closed form (elementwise only; exact divide so
        # rows sum to 1 for downstream GMM fitting).
        l0 = logits[0:1, :]
        l1 = logits[1:2, :]
        m = jnp.maximum(l0, l1)
        e0 = jnp.exp(l0 - m)
        e1 = jnp.exp(l1 - m)
        inv = 1.0 / (e0 + e1)
        gamma_ref[...] = jnp.concatenate([e0 * inv, e1 * inv], axis=0)

    return kernel


# ----------------------------------------------------------------------------
# Wrapper
# ----------------------------------------------------------------------------
def dagmm_forward(x, params):
    B, input_dim = x.shape
    latent_dim = params["we3"].shape[0]

    slab, offsets = pack_params(params)

    LANE = 128
    TB = min(1024, _round_up(max(B, 1), LANE))   # batch tile (lane axis)
    Bp = _round_up(B, TB)
    grid = (Bp // TB,)

    # transpose once in the wrapper; pad batch (lanes) to a multiple of TB
    x_t = jnp.pad(x.T, ((0, 0), (0, Bp - B)))    # (input_dim, Bp)

    kernel = make_dagmm_kernel(offsets, latent_dim)

    zc_t, xhat_t, rec_t, gamma_t = pl.pallas_call(
        kernel,
        out_shape=(
            jax.ShapeDtypeStruct((latent_dim, Bp), jnp.float32),
            jax.ShapeDtypeStruct((input_dim, Bp), jnp.float32),
            jax.ShapeDtypeStruct((1, Bp), jnp.float32),
            jax.ShapeDtypeStruct((2, Bp), jnp.float32),
        ),
        grid=grid,
        in_specs=[
            pl.BlockSpec((input_dim, TB), lambda i: (0, i)),
            pl.BlockSpec(slab.shape, lambda i: (0, 0)),   # resident weight slab
        ],
        out_specs=(
            pl.BlockSpec((latent_dim, TB), lambda i: (0, i)),
            pl.BlockSpec((input_dim, TB), lambda i: (0, i)),
            pl.BlockSpec((1, TB), lambda i: (0, i)),
            pl.BlockSpec((2, TB), lambda i: (0, i)),
        ),
        compiler_params=pltpu.CompilerParams(
            dimension_semantics=("parallel",),
        ),
    )(x_t, slab)

    # Glue only: un-transpose, strip padding, assemble z = [z_c, rec_error].
    z_c = zc_t[:, :B].T
    x_hat = xhat_t[:, :B].T
    rec_error = rec_t[:, :B].T
    gamma = gamma_t[:, :B].T
    z = jnp.concatenate([z_c, rec_error], axis=1)
    return z_c, x_hat, rec_error, z, gamma


# ----------------------------------------------------------------------------
# Pure-JAX reference (mirrors the PyTorch module)
# ----------------------------------------------------------------------------
def reference_forward(x, p):
    def lin(h, w, b):
        return h @ w.T + b

    h = jax.nn.relu(lin(x, p["we1"], p["be1"]))
    h = jax.nn.relu(lin(h, p["we2"], p["be2"]))
    z_c = lin(h, p["we3"], p["be3"])
    d = jax.nn.relu(lin(z_c, p["wd1"], p["bd1"]))
    d = jax.nn.relu(lin(d, p["wd2"], p["bd2"]))
    x_hat = lin(d, p["wd3"], p["bd3"])
    rec = jnp.mean((x - x_hat) ** 2, axis=1, keepdims=True)
    z = jnp.concatenate([z_c, rec], axis=1)
    eh = jnp.tanh(lin(z, p["wes1"], p["bes1"]))
    gamma = jax.nn.softmax(lin(eh, p["wes2"], p["bes2"]), axis=1)
    return z_c, x_hat, rec, z, gamma


if __name__ == "__main__":
    B = 8
    INPUT_DIM = 16
    LATENT_DIM = 4

    key = jax.random.PRNGKey(0)
    k_x, k_p = jax.random.split(key)
    x = jax.random.normal(k_x, (B, INPUT_DIM), dtype=jnp.float32)
    params = init_params(k_p, INPUT_DIM, LATENT_DIM)

    forward = jax.jit(dagmm_forward)
    outs = jax.block_until_ready(forward(x, params))
    z_c, x_hat, rec_error, z, gamma = outs

    assert z_c.shape == (B, LATENT_DIM)
    assert x_hat.shape == (B, INPUT_DIM)
    assert rec_error.shape == (B, 1)
    assert z.shape == (B, LATENT_DIM + 1)
    assert gamma.shape == (B, 2)
    # softmax rows sum to 1
    assert bool(jnp.allclose(jnp.sum(gamma, axis=1), 1.0, atol=1e-5))

    # numerical check vs plain-JAX reference
    ref = reference_forward(x, params)
    for got, want in zip(outs, ref):
        assert bool(jnp.allclose(got, want, atol=2e-3, rtol=2e-3))

    print("KERNEL_OK")
</pallas_src>

<mosaic_0001>
module attributes {stable_mosaic.version = 11 : i64} {
  func.func @kernel(%arg0: i32, %arg1: memref<16x128xf32, #tpu.memory_space<vmem>>, %arg2: memref<192x16xf32, #tpu.memory_space<vmem>>, %arg3: memref<4x128xf32, #tpu.memory_space<vmem>>, %arg4: memref<16x128xf32, #tpu.memory_space<vmem>>, %arg5: memref<1x128xf32, #tpu.memory_space<vmem>>, %arg6: memref<2x128xf32, #tpu.memory_space<vmem>>) attributes {dimension_semantics = [#tpu.dimension_semantics<parallel>], iteration_bounds = array<i64: 1>, scalar_prefetch = 0 : i64, scratch_operands = 0 : i64, tpu.core_type = #tpu.core_type<tc>, window_params = [{transform_indices = @transform_0, window_bounds = array<i64: 16, 128>}, {pipeline_mode = #tpu.pipeline_mode<synchronous>, transform_indices = @transform_1, window_bounds = array<i64: 192, 16>}, {transform_indices = @transform_2, window_bounds = array<i64: 4, 128>}, {transform_indices = @transform_3, window_bounds = array<i64: 16, 128>}, {transform_indices = @transform_4, window_bounds = array<i64: 1, 128>}, {transform_indices = @transform_5, window_bounds = array<i64: 2, 128>}]} {
    %c0 = arith.constant 0 : index
    %c0_0 = arith.constant 0 : index
    %0 = vector.load %arg1[%c0, %c0_0] : memref<16x128xf32, #tpu.memory_space<vmem>>, vector<16x128xf32>
    %c0_1 = arith.constant 0 : index
    %c0_2 = arith.constant 0 : index
    %1 = vector.load %arg2[%c0_1, %c0_2] : memref<192x16xf32, #tpu.memory_space<vmem>>, vector<10x16xf32>
    %cst = arith.constant dense<0.000000e+00> : vector<10x128xf32>
    %2 = tpu.matmul %1, %0, %cst {dimension_numbers = #tpu.dot_dimension_numbers<[1], [0], [0], [1], [0, 0, 1, 1], [], []>} : vector<10x16xf32>, vector<16x128xf32>, vector<10x128xf32> -> vector<10x128xf32>
    %c16 = arith.constant 16 : index
    %c0_3 = arith.constant 0 : index
    %3 = vector.load %arg2[%c16, %c0_3] : memref<192x16xf32, #tpu.memory_space<vmem>>, vector<10x1xf32>
    %4 = vector.broadcast %3 : vector<10x1xf32> to vector<10x128xf32>
    %5 = arith.addf %2, %4 : vector<10x128xf32>
    %cst_4 = arith.constant 0.000000e+00 : f32
    %6 = vector.broadcast %cst_4 : f32 to vector<10x128xf32>
    %7 = arith.maximumf %5, %6 : vector<10x128xf32>
    %c32 = arith.constant 32 : index
    %c0_5 = arith.constant 0 : index
    %8 = vector.load %arg2[%c32, %c0_5] : memref<192x16xf32, #tpu.memory_space<vmem>>, vector<5x10xf32>
    %cst_6 = arith.constant dense<0.000000e+00> : vector<5x128xf32>
    %9 = tpu.matmul %8, %7, %cst_6 {dimension_numbers = #tpu.dot_dimension_numbers<[1], [0], [0], [1], [0, 0, 1, 1], [], []>} : vector<5x10xf32>, vector<10x128xf32>, vector<5x128xf32> -> vector<5x128xf32>
    %c40 = arith.constant 40 : index
    %c0_7 = arith.constant 0 : index
    %10 = vector.load %arg2[%c40, %c0_7] : memref<192x16xf32, #tpu.memory_space<vmem>>, vector<5x1xf32>
    %11 = vector.broadcast %10 : vector<5x1xf32> to vector<5x128xf32>
    %12 = arith.addf %9, %11 : vector<5x128xf32>
    %cst_8 = arith.constant 0.000000e+00 : f32
    %13 = vector.broadcast %cst_8 : f32 to vector<5x128xf32>
    %14 = arith.maximumf %12, %13 : vector<5x128xf32>
    %c48 = arith.constant 48 : index
    %c0_9 = arith.constant 0 : index
    %15 = vector.load %arg2[%c48, %c0_9] : memref<192x16xf32, #tpu.memory_space<vmem>>, vector<4x5xf32>
    %cst_10 = arith.constant dense<0.000000e+00> : vector<4x128xf32>
    %16 = tpu.matmul %15, %14, %cst_10 {dimension_numbers = #tpu.dot_dimension_numbers<[1], [0], [0], [1], [0, 0, 1, 1], [], []>} : vector<4x5xf32>, vector<5x128xf32>, vector<4x128xf32> -> vector<4x128xf32>
    %c56 = arith.constant 56 : index
    %c0_11 = arith.constant 0 : index
    %17 = vector.load %arg2[%c56, %c0_11] : memref<192x16xf32, #tpu.memory_space<vmem>>, vector<4x1xf32>
    %18 = vector.broadcast %17 : vector<4x1xf32> to vector<4x128xf32>
    %19 = arith.addf %16, %18 : vector<4x128xf32>
    %c0_12 = arith.constant 0 : index
    %c0_13 = arith.constant 0 : index
    %20 = vector.load %arg3[%c0_12, %c0_13] : memref<4x128xf32, #tpu.memory_space<vmem>>, vector<4x128xf32>
    tpu.vector_store %arg3[%c0_12, %c0_13], %19 {strides = array<i32>} : memref<4x128xf32, #tpu.memory_space<vmem>>, vector<4x128xf32>,
    %c64 = arith.constant 64 : index
    %c0_14 = arith.constant 0 : index
    %21 = vector.load %arg2[%c64, %c0_14] : memref<192x16xf32, #tpu.memory_space<vmem>>, vector<5x4xf32>
    %cst_15 = arith.constant dense<0.000000e+00> : vector<5x128xf32>
    %22 = tpu.matmul %21, %19, %cst_15 {dimension_numbers = #tpu.dot_dimension_numbers<[1], [0], [0], [1], [0, 0, 1, 1], [], []>} : vector<5x4xf32>, vector<4x128xf32>, vector<5x128xf32> -> vector<5x128xf32>
    %c72 = arith.constant 72 : index
    %c0_16 = arith.constant 0 : index
    %23 = vector.load %arg2[%c72, %c0_16] : memref<192x16xf32, #tpu.memory_space<vmem>>, vector<5x1xf32>
    %24 = vector.broadcast %23 : vector<5x1xf32> to vector<5x128xf32>
    %25 = arith.addf %22, %24 : vector<5x128xf32>
    %cst_17 = arith.constant 0.000000e+00 : f32
    %26 = vector.broadcast %cst_17 : f32 to vector<5x128xf32>
    %27 = arith.maximumf %25, %26 : vector<5x128xf32>
    %c80 = arith.constant 80 : index
    %c0_18 = arith.constant 0 : index
    %28 = vector.load %arg2[%c80, %c0_18] : memref<192x16xf32, #tpu.memory_space<vmem>>, vector<10x5xf32>
    %cst_19 = arith.constant dense<0.000000e+00> : vector<10x128xf32>
    %29 = tpu.matmul %28, %27, %cst_19 {dimension_numbers = #tpu.dot_dimension_numbers<[1], [0], [0], [1], [0, 0, 1, 1], [], []>} : vector<10x5xf32>, vector<5x128xf32>, vector<10x128xf32> -> vector<10x128xf32>
    %c96 = arith.constant 96 : index
    %c0_20 = arith.constant 0 : index
    %30 = vector.load %arg2[%c96, %c0_20] : memref<192x16xf32, #tpu.memory_space<vmem>>, vector<10x1xf32>
    %31 = vector.broadcast %30 : vector<10x1xf32> to vector<10x128xf32>
    %32 = arith.addf %29, %31 : vector<10x128xf32>
    %cst_21 = arith.constant 0.000000e+00 : f32
    %33 = vector.broadcast %cst_21 : f32 to vector<10x128xf32>
    %34 = arith.maximumf %32, %33 : vector<10x128xf32>
    %c112 = arith.constant 112 : index
    %c0_22 = arith.constant 0 : index
    %35 = vector.load %arg2[%c112, %c0_22] : memref<192x16xf32, #tpu.memory_space<vmem>>, vector<16x10xf32>
    %cst_23 = arith.constant dense<0.000000e+00> : vector<16x128xf32>
    %36 = tpu.matmul %35, %34, %cst_23 {dimension_numbers = #tpu.dot_dimension_numbers<[1], [0], [0], [1], [0, 0, 1, 1], [], []>} : vector<16x10xf32>, vector<10x128xf32>, vector<16x128xf32> -> vector<16x128xf32>
    %c128 = arith.constant 128 : index
    %c0_24 = arith.constant 0 : index
    %37 = vector.load %arg2[%c128, %c0_24] : memref<192x16xf32, #tpu.memory_space<vmem>>, vector<16x1xf32>
    %38 = vector.broadcast %37 : vector<16x1xf32> to vector<16x128xf32>
    %39 = arith.addf %36, %38 : vector<16x128xf32>
    %c0_25 = arith.constant 0 : index
    %c0_26 = arith.constant 0 : index
    %40 = vector.load %arg4[%c0_25, %c0_26] : memref<16x128xf32, #tpu.memory_space<vmem>>, vector<16x128xf32>
    tpu.vector_store %arg4[%c0_25, %c0_26], %39 {strides = array<i32>} : memref<16x128xf32, #tpu.memory_space<vmem>>, vector<16x128xf32>,
    %41 = arith.subf %0, %39 : vector<16x128xf32>
    %42 = arith.mulf %41, %41 : vector<16x128xf32>
    %cst_27 = arith.constant dense<0.000000e+00> : vector<128xf32>
    %43 = vector.multi_reduction <add>, %42, %cst_27 [0] : vector<16x128xf32> to vector<128xf32>
    %44 = vector.shape_cast %43 : vector<128xf32> to vector<1x128xf32>
    %cst_28 = arith.constant 1.600000e+01 : f32
    %45 = vector.broadcast %cst_28 : f32 to vector<1x128xf32>
    %46 = arith.divf %44, %45 : vector<1x128xf32>
    %c0_29 = arith.constant 0 : index
    %c0_30 = arith.constant 0 : index
    %47 = vector.load %arg5[%c0_29, %c0_30] : memref<1x128xf32, #tpu.memory_space<vmem>>, vector<1x128xf32>
    tpu.vector_store %arg5[%c0_29, %c0_30], %46 {strides = array<i32>} : memref<1x128xf32, #tpu.memory_space<vmem>>, vector<1x128xf32>,
    %c144 = arith.constant 144 : index
    %c0_31 = arith.constant 0 : index
    %48 = vector.load %arg2[%c144, %c0_31] : memref<192x16xf32, #tpu.memory_space<vmem>>, vector<10x5xf32>
    %49 = vector.extract_strided_slice %48 {offsets = [0, 0], sizes = [10, 4], strides = [1, 1]} : vector<10x5xf32> to vector<10x4xf32>
    %cst_32 = arith.constant dense<0.000000e+00> : vector<10x128xf32>
    %50 = tpu.matmul %49, %19, %cst_32 {dimension_numbers = #tpu.dot_dimension_numbers<[1], [0], [0], [1], [0, 0, 1, 1], [], []>} : vector<10x4xf32>, vector<4x128xf32>, vector<10x128xf32> -> vector<10x128xf32>
    %51 = vector.extract_strided_slice %48 {offsets = [0, 4], sizes = [10, 1], strides = [1, 1]} : vector<10x5xf32> to vector<10x1xf32>
    %52 = vector.broadcast %51 : vector<10x1xf32> to vector<10x128xf32>
    %53 = vector.broadcast %46 : vector<1x128xf32> to vector<10x128xf32>
    %54 = arith.mulf %52, %53 : vector<10x128xf32>
    %55 = arith.addf %50, %54 : vector<10x128xf32>
    %c160 = arith.constant 160 : index
    %c0_33 = arith.constant 0 : index
    %56 = vector.load %arg2[%c160, %c0_33] : memref<192x16xf32, #tpu.memory_space<vmem>>, vector<10x1xf32>
    %57 = vector.broadcast %56 : vector<10x1xf32> to vector<10x128xf32>
    %58 = arith.addf %55, %57 : vector<10x128xf32>
    %59 = math.tanh %58 : vector<10x128xf32>
    %c176 = arith.constant 176 : index
    %c0_34 = arith.constant 0 : index
    %60 = vector.load %arg2[%c176, %c0_34] : memref<192x16xf32, #tpu.memory_space<vmem>>, vector<2x10xf32>
    %cst_35 = arith.constant dense<0.000000e+00> : vector<2x128xf32>
    %61 = tpu.matmul %60, %59, %cst_35 {dimension_numbers = #tpu.dot_dimension_numbers<[1], [0], [0], [1], [0, 0, 1, 1], [], []>} : vector<2x10xf32>, vector<10x128xf32>, vector<2x128xf32> -> vector<2x128xf32>
    %c184 = arith.constant 184 : index
    %c0_36 = arith.constant 0 : index
    %62 = vector.load %arg2[%c184, %c0_36] : memref<192x16xf32, #tpu.memory_space<vmem>>, vector<2x1xf32>
    %63 = vector.broadcast %62 : vector<2x1xf32> to vector<2x128xf32>
    %64 = arith.addf %61, %63 : vector<2x128xf32>
    %65 = vector.extract_strided_slice %64 {offsets = [0, 0], sizes = [1, 128], strides = [1, 1]} : vector<2x128xf32> to vector<1x128xf32>
    %66 = vector.extract_strided_slice %64 {offsets = [1, 0], sizes = [1, 128], strides = [1, 1]} : vector<2x128xf32> to vector<1x128xf32>
    %67 = arith.maximumf %65, %66 : vector<1x128xf32>
    %68 = arith.subf %65, %67 : vector<1x128xf32>
    %69 = math.exp %68 : vector<1x128xf32>
    %70 = arith.subf %66, %67 : vector<1x128xf32>
    %71 = math.exp %70 : vector<1x128xf32>
    %72 = arith.addf %69, %71 : vector<1x128xf32>
    %cst_37 = arith.constant 1.000000e+00 : f32
    %73 = vector.broadcast %cst_37 : f32 to vector<1x128xf32>
    %74 = arith.divf %73, %72 : vector<1x128xf32>
    %75 = arith.mulf %69, %74 : vector<1x128xf32>
    %76 = arith.mulf %71, %74 : vector<1x128xf32>
    %77 = tpu.concatenate %75, %76 in 0 : vector<1x128xf32>, vector<1x128xf32> -> vector<2x128xf32>
    %c0_38 = arith.constant 0 : index
    %c0_39 = arith.constant 0 : index
    %78 = vector.load %arg6[%c0_38, %c0_39] : memref<2x128xf32, #tpu.memory_space<vmem>>, vector<2x128xf32>
    tpu.vector_store %arg6[%c0_38, %c0_39], %77 {strides = array<i32>} : memref<2x128xf32, #tpu.memory_space<vmem>>, vector<2x128xf32>,
    return
  }
  func.func @transform_0(%arg0: i32) -> (i32, i32) {
    %c0_i32 = arith.constant 0 : i32
    %c0_i32_0 = arith.constant 0 : i32
    return %c0_i32, %arg0 : i32, i32
  }
  func.func @transform_1(%arg0: i32) -> (i32, i32) {
    %c0_i32 = arith.constant 0 : i32
    %c0_i32_0 = arith.constant 0 : i32
    %c0_i32_1 = arith.constant 0 : i32
    return %c0_i32, %c0_i32_0 : i32, i32
  }
  func.func @transform_2(%arg0: i32) -> (i32, i32) {
    %c0_i32 = arith.constant 0 : i32
    %c0_i32_0 = arith.constant 0 : i32
    return %c0_i32, %arg0 : i32, i32
  }
  func.func @transform_3(%arg0: i32) -> (i32, i32) {
    %c0_i32 = arith.constant 0 : i32
    %c0_i32_0 = arith.constant 0 : i32
    return %c0_i32, %arg0 : i32, i32
  }
  func.func @transform_4(%arg0: i32) -> (i32, i32) {
    %c0_i32 = arith.constant 0 : i32
    %c0_i32_0 = arith.constant 0 : i32
    return %c0_i32, %arg0 : i32, i32
  }
  func.func @transform_5(%arg0: i32) -> (i32, i32) {
    %c0_i32 = arith.constant 0 : i32
    %c0_i32_0 = arith.constant 0 : i32
    return %c0_i32, %arg0 : i32, i32
  }
}

</mosaic_0001>

<llo_original>
// kernel: dagmm_forward.1
$region0: #{dagmm_forward.1}
  #allocation0 [shape = 'u32[]', space=smem, size = 0x4, offset = 0x4, fixed_abs, tag = 'smem constant byte address 0x4 - core index']
  #allocation1 [shape = 'u32[144,128]{1,0:T(1,128)}', space=vmem, size = 0x12000, scoped, tag = 'internal scratch']
  %s0 = inlined_call_operand.vmem [shape: f32[16,128], index: 0, kind: input, shape index: {}]
  %s1 = inlined_call_operand.vmem [shape: f32[192,16], index: 1, kind: input, shape index: {}]
  %s2 = inlined_call_operand.vmem [shape: f32[4,128], index: 2, kind: output, shape index: {0}]
  %s3 = inlined_call_operand.vmem [shape: f32[16,128], index: 3, kind: output, shape index: {1}]
  %s4 = inlined_call_operand.vmem [shape: f32[1,128], index: 4, kind: output, shape index: {2}]
  %s5 = inlined_call_operand.vmem [shape: f32[2,128], index: 5, kind: output, shape index: {3}]
  %6 = xla_tuple %s2, %s3, %s4, %s5
  %s7 = sld [smem:[#allocation0]]
  $region42: #{dagmm_forward.1} parent=0
    _
  %s9 = ssub.s32 1, %s7
  %s10 = scalar_select 0, %s9, %s7
  // Predicated region
  $region2: #{dagmm_forward.1} parent=0 // pred_check
    _
  $region3: #{dagmm_forward.1} parent=0 // pred_check_branch
    %12 = sbr.rel (0) target = $region5
  $region4: #{dagmm_forward.1} parent=0 // pred_region
    _
  $region5: #{dagmm_forward.1} parent=0 // pred_fallthru
    _
  // Predicated region
  $region6: #{dagmm_forward.1} parent=0 // pred_check
    _
  $region7: #{dagmm_forward.1} parent=0 // pred_check_branch
    %14 = sbr.rel (0) target = $region9
  $region8: #{dagmm_forward.1} parent=0 // pred_region
    _
  $region9: #{dagmm_forward.1} parent=0 // pred_fallthru
    _
  %v15 = vld [vmem:[%s0] sm:$0xff]
  %v16 = vld [vmem:[%s0 + $0x8] sm:$0xff]
  %v17 = vld [vmem:[%s1] sm:$0xff]
  %v18 = vld [vmem:[%s1 + $0x8] sm:$0x3]
  %v19 = vld [vmem:[%s1 + $0x10] sm:$0xff]
  %v20 = vld [vmem:[%s1 + $0x18] sm:$0x3]
  %22 = vset.pattern.permute.xlu0 0
  %23 = vperm.xlu0 %22, %v19
  %v24 = vpop.permute.xlu0 %23
  %27 = vset.pattern.permute.xlu0 0
  %28 = vperm.xlu0 %27, %v20
  %v29 = vpop.permute.xlu0 %28
  %vm31 = vcmask 130048
  %v33 = vsel %vm31, %v17, 0
  %v36 = vsel %vm31, %v18, 0
  %38 = vmatprep.subr.mxu0 0.0
  %39 = vmatpush1.msra.mxu0 %v15
  %40 = vmatprep.subr.mxu0 0.0
  %41 = vmatpush1.msra.mxu0 %v16
  %42 = vmatprep.subr.mxu0 0.0
  %43 = vmatpush1.msra.mxu0 0.0
  %44 = vmatprep.subr.mxu0 0.0
  %45 = vmatpush1.msra.mxu0 0.0
  %46 = vmatprep.subr.mxu0 0.0
  %47 = vmatpush1.msra.mxu0 0.0
  %48 = vmatprep.subr.mxu0 0.0
  %49 = vmatpush1.msra.mxu0 0.0
  %50 = vmatprep.subr.mxu0 0.0
  %51 = vmatpush1.msra.mxu0 0.0
  %52 = vmatprep.subr.mxu0 0.0
  %53 = vmatpush1.msra.mxu0 0.0
  %54 = vmatprep.subr.mxu0 0.0
  %55 = vmatpush1.msra.mxu0 0.0
  %56 = vmatprep.subr.mxu0 0.0
  %57 = vmatpush1.msra.mxu0 0.0
  %58 = vmatprep.subr.mxu0 0.0
  %59 = vmatpush1.msra.mxu0 0.0
  %60 = vmatprep.subr.mxu0 0.0
  %61 = vmatpush1.msra.mxu0 0.0
  %62 = vmatprep.subr.mxu0 0.0
  %63 = vmatpush1.msra.mxu0 0.0
  %64 = vmatprep.subr.mxu0 0.0
  %65 = vmatpush1.msra.mxu0 0.0
  %66 = vmatprep.subr.mxu0 0.0
  %67 = vmatpush1.msra.mxu0 0.0
  %68 = vmatprep.subr.mxu0 0.0
  %69 = vmatpush1.msra.mxu0 0.0
  %70 = vmatprep.subr.mxu0 0.0
  %71 = vmatpush1.msra.mxu0 0.0
  %72 = vmatprep.subr.mxu0 0.0
  %73 = vmatpush1.msra.mxu0 0.0
  %74 = vmatprep.subr.mxu0 0.0
  %75 = vmatpush1.msra.mxu0 0.0
  %76 = vmatprep.subr.mxu0 0.0
  %77 = vmatpush1.msra.mxu0 0.0
  %78 = vmatprep.subr.mxu0 0.0
  %79 = vmatpush1.msra.mxu0 0.0
  %80 = vmatprep.subr.mxu0 0.0
  %81 = vmatpush1.msra.mxu0 0.0
  %82 = vmatprep.subr.mxu0 0.0
  %83 = vmatpush1.msra.mxu0 0.0
  %84 = vmatprep.subr.mxu0 0.0
  %85 = vmatpush1.msra.mxu0 0.0
  %86 = vmatprep.subr.mxu0 0.0
  %87 = vmatpush1.msra.mxu0 0.0
  %88 = vmatprep.subr.mxu0 0.0
  %89 = vmatpush1.msra.mxu0 0.0
  %90 = vmatprep.subr.mxu0 0.0
  %91 = vmatpush1.msra.mxu0 0.0
  %92 = vmatprep.subr.mxu0 0.0
  %93 = vmatpush1.msra.mxu0 0.0
  %94 = vmatprep.subr.mxu0 0.0
  %95 = vmatpush1.msra.mxu0 0.0
  %96 = vmatprep.subr.mxu0 0.0
  %97 = vmatpush1.msra.mxu0 0.0
  %98 = vmatprep.subr.mxu0 0.0
  %99 = vmatpush1.msra.mxu0 0.0
  %100 = vmatprep.subr.mxu0 0.0
  %101 = vmatpush1.msra.mxu0 0.0
  %102 = vmatprep.mubr.f32.mxu0 0.0
  %103 = vmatmul.mubr.f32.gmra.mrb[0].mxu0 %v33
  %v104 = vpop.f32.mrb[0].mxu0
  %v105 = vadd.f32 %v24, %v104
  %v106 = vpop.f32.mrb[0].mxu0
  %107 = vmatprep.mubr.f32.mxu0 0.0
  %108 = vmatmul.mubr.f32.gmra.mrb[0].mxu0 %v36
  %v109 = vpop.f32.mrb[0].mxu0
  %v110 = vadd.f32 %v29, %v109
  %v111 = vpop.f32.mrb[0].mxu0
  %112 = vdwg.mxu0
  %v113 = vmax.f32 %v105, 0.0
  %v114 = vmax.f32 %v110, 0.0
  %v115 = vld [vmem:[%s1 + $0x20] sm:$0x1f]
  %v116 = vld [vmem:[%s1 + $0x28] sm:$0x1f]
  %118 = vset.pattern.permute.xlu0 0
  %119 = vperm.xlu0 %118, %v116
  %v120 = vpop.permute.xlu0 %119
  %vm122 = vcmask 80896
  %v124 = vsel %vm122, %v115, 0
  %vm126 = vcmask 1041408
  %v128 = vsel %vm126, %v114, 0
  %130 = vmatprep.subr.mxu0 0.0
  %131 = vmatpush1.msra.mxu0 %v113
  %132 = vmatprep.subr.mxu0 0.0
  %133 = vmatpush1.msra.mxu0 %v128
  %134 = vmatprep.subr.mxu0 0.0
  %135 = vmatpush1.msra.mxu0 0.0
  %136 = vmatprep.subr.mxu0 0.0
  %137 = vmatpush1.msra.mxu0 0.0
  %138 = vmatprep.subr.mxu0 0.0
  %139 = vmatpush1.msra.mxu0 0.0
  %140 = vmatprep.subr.mxu0 0.0
  %141 = vmatpush1.msra.mxu0 0.0
  %142 = vmatprep.subr.mxu0 0.0
  %143 = vmatpush1.msra.mxu0 0.0
  %144 = vmatprep.subr.mxu0 0.0
  %145 = vmatpush1.msra.mxu0 0.0
  %146 = vmatprep.subr.mxu0 0.0
  %147 = vmatpush1.msra.mxu0 0.0
  %148 = vmatprep.subr.mxu0 0.0
  %149 = vmatpush1.msra.mxu0 0.0
  %150 = vmatprep.subr.mxu0 0.0
  %151 = vmatpush1.msra.mxu0 0.0
  %152 = vmatprep.subr.mxu0 0.0
  %153 = vmatpush1.msra.mxu0 0.0
  %154 = vmatprep.subr.mxu0 0.0
  %155 = vmatpush1.msra.mxu0 0.0
  %156 = vmatprep.subr.mxu0 0.0
  %157 = vmatpush1.msra.mxu0 0.0
  %158 = vmatprep.subr.mxu0 0.0
  %159 = vmatpush1.msra.mxu0 0.0
  %160 = vmatprep.subr.mxu0 0.0
  %161 = vmatpush1.msra.mxu0 0.0
  %162 = vmatprep.subr.mxu0 0.0
  %163 = vmatpush1.msra.mxu0 0.0
  %164 = vmatprep.subr.mxu0 0.0
  %165 = vmatpush1.msra.mxu0 0.0
  %166 = vmatprep.subr.mxu0 0.0
  %167 = vmatpush1.msra.mxu0 0.0
  %168 = vmatprep.subr.mxu0 0.0
  %169 = vmatpush1.msra.mxu0 0.0
  %170 = vmatprep.subr.mxu0 0.0
  %171 = vmatpush1.msra.mxu0 0.0
  %172 = vmatprep.subr.mxu0 0.0
  %173 = vmatpush1.msra.mxu0 0.0
  %174 = vmatprep.subr.mxu0 0.0
  %175 = vmatpush1.msra.mxu0 0.0
  %176 = vmatprep.subr.mxu0 0.0
  %177 = vmatpush1.msra.mxu0 0.0
  %178 = vmatprep.subr.mxu0 0.0
  %179 = vmatpush1.msra.mxu0 0.0
  %180 = vmatprep.subr.mxu0 0.0
  %181 = vmatpush1.msra.mxu0 0.0
  %182 = vmatprep.subr.mxu0 0.0
  %183 = vmatpush1.msra.mxu0 0.0
  %184 = vmatprep.subr.mxu0 0.0
  %185 = vmatpush1.msra.mxu0 0.0
  %186 = vmatprep.subr.mxu0 0.0
  %187 = vmatpush1.msra.mxu0 0.0
  %188 = vmatprep.subr.mxu0 0.0
  %189 = vmatpush1.msra.mxu0 0.0
  %190 = vmatprep.subr.mxu0 0.0
  %191 = vmatpush1.msra.mxu0 0.0
  %192 = vmatprep.subr.mxu0 0.0
  %193 = vmatpush1.msra.mxu0 0.0
  %194 = vmatprep.mubr.f32.mxu0 0.0
  %195 = vmatmul.mubr.f32.gmra.mrb[0].mxu0 %v124
  %v196 = vpop.f32.mrb[0].mxu0
  %v197 = vadd.f32 %v120, %v196
  %v198 = vpop.f32.mrb[0].mxu0
  %199 = vdwg.mxu0
  %v200 = vmax.f32 %v197, 0.0
  %v201 = vld [vmem:[%s1 + $0x30] sm:$0xf]
  %v202 = vld [vmem:[%s1 + $0x38] sm:$0xf]
  %204 = vset.pattern.permute.xlu0 0
  %205 = vperm.xlu0 %204, %v202
  %v206 = vpop.permute.xlu0 %205
  %vm208 = vcmask 39936
  %v210 = vsel %vm208, %v201, 0
  %vm212 = vcmask 1044480
  %v214 = vsel %vm212, %v200, 0
  %216 = vmatprep.subr.mxu0 0.0
  %217 = vmatpush1.msra.mxu0 %v214
  %218 = vmatprep.subr.mxu0 0.0
  %219 = vmatpush1.msra.mxu0 0.0
  %220 = vmatprep.subr.mxu0 0.0
  %221 = vmatpush1.msra.mxu0 0.0
  %222 = vmatprep.subr.mxu0 0.0
  %223 = vmatpush1.msra.mxu0 0.0
  %224 = vmatprep.subr.mxu0 0.0
  %225 = vmatpush1.msra.mxu0 0.0
  %226 = vmatprep.subr.mxu0 0.0
  %227 = vmatpush1.msra.mxu0 0.0
  %228 = vmatprep.subr.mxu0 0.0
  %229 = vmatpush1.msra.mxu0 0.0
  %230 = vmatprep.subr.mxu0 0.0
  %231 = vmatpush1.msra.mxu0 0.0
  %232 = vmatprep.subr.mxu0 0.0
  %233 = vmatpush1.msra.mxu0 0.0
  %234 = vmatprep.subr.mxu0 0.0
  %235 = vmatpush1.msra.mxu0 0.0
  %236 = vmatprep.subr.mxu0 0.0
  %237 = vmatpush1.msra.mxu0 0.0
  %238 = vmatprep.subr.mxu0 0.0
  %239 = vmatpush1.msra.mxu0 0.0
  %240 = vmatprep.subr.mxu0 0.0
  %241 = vmatpush1.msra.mxu0 0.0
  %242 = vmatprep.subr.mxu0 0.0
  %243 = vmatpush1.msra.mxu0 0.0
  %244 = vmatprep.subr.mxu0 0.0
  %245 = vmatpush1.msra.mxu0 0.0
  %246 = vmatprep.subr.mxu0 0.0
  %247 = vmatpush1.msra.mxu0 0.0
  %248 = vmatprep.subr.mxu0 0.0
  %249 = vmatpush1.msra.mxu0 0.0
  %250 = vmatprep.subr.mxu0 0.0
  %251 = vmatpush1.msra.mxu0 0.0
  %252 = vmatprep.subr.mxu0 0.0
  %253 = vmatpush1.msra.mxu0 0.0
  %254 = vmatprep.subr.mxu0 0.0
  %255 = vmatpush1.msra.mxu0 0.0
  %256 = vmatprep.subr.mxu0 0.0
  %257 = vmatpush1.msra.mxu0 0.0
  %258 = vmatprep.subr.mxu0 0.0
  %259 = vmatpush1.msra.mxu0 0.0
  %260 = vmatprep.subr.mxu0 0.0
  %261 = vmatpush1.msra.mxu0 0.0
  %262 = vmatprep.subr.mxu0 0.0
  %263 = vmatpush1.msra.mxu0 0.0
  %264 = vmatprep.subr.mxu0 0.0
  %265 = vmatpush1.msra.mxu0 0.0
  %266 = vmatprep.subr.mxu0 0.0
  %267 = vmatpush1.msra.mxu0 0.0
  %268 = vmatprep.subr.mxu0 0.0
  %269 = vmatpush1.msra.mxu0 0.0
  %270 = vmatprep.subr.mxu0 0.0
  %271 = vmatpush1.msra.mxu0 0.0
  %272 = vmatprep.subr.mxu0 0.0
  %273 = vmatpush1.msra.mxu0 0.0
  %274 = vmatprep.subr.mxu0 0.0
  %275 = vmatpush1.msra.mxu0 0.0
  %276 = vmatprep.subr.mxu0 0.0
  %277 = vmatpush1.msra.mxu0 0.0
  %278 = vmatprep.subr.mxu0 0.0
  %279 = vmatpush1.msra.mxu0 0.0
  %280 = vmatprep.mubr.f32.mxu0 0.0
  %281 = vmatmul.mubr.f32.gmra.mrb[0].mxu0 %v210
  %v282 = vpop.f32.mrb[0].mxu0
  %v283 = vadd.f32 %v206, %v282
  %v284 = vpop.f32.mrb[0].mxu0
  %285 = vdwg.mxu0
  %286 = vst [vmem:[%s2] sm:$0xf] %v283
  %v287 = vld [vmem:[%s1 + $0x40] sm:$0x1f]
  %v288 = vld [vmem:[%s1 + $0x48] sm:$0x1f]
  %290 = vset.pattern.permute.xlu0 0
  %291 = vperm.xlu0 %290, %v288
  %v292 = vpop.permute.xlu0 %291
  %vm294 = vcmask 31744
  %v296 = vsel %vm294, %v287, 0
  %vm298 = vcmask 1043456
  %v300 = vsel %vm298, %v283, 0
  %302 = vmatprep.subr.mxu0 0.0
  %303 = vmatpush1.msra.mxu0 %v300
  %304 = vmatprep.subr.mxu0 0.0
  %305 = vmatpush1.msra.mxu0 0.0
  %306 = vmatprep.subr.mxu0 0.0
  %307 = vmatpush1.msra.mxu0 0.0
  %308 = vmatprep.subr.mxu0 0.0
  %309 = vmatpush1.msra.mxu0 0.0
  %310 = vmatprep.subr.mxu0 0.0
  %311 = vmatpush1.msra.mxu0 0.0
  %312 = vmatprep.subr.mxu0 0.0
  %313 = vmatpush1.msra.mxu0 0.0
  %314 = vmatprep.subr.mxu0 0.0
  %315 = vmatpush1.msra.mxu0 0.0
  %316 = vmatprep.subr.mxu0 0.0
  %317 = vmatpush1.msra.mxu0 0.0
  %318 = vmatprep.subr.mxu0 0.0
  %319 = vmatpush1.msra.mxu0 0.0
  %320 = vmatprep.subr.mxu0 0.0
  %321 = vmatpush1.msra.mxu0 0.0
  %322 = vmatprep.subr.mxu0 0.0
  %323 = vmatpush1.msra.mxu0 0.0
  %324 = vmatprep.subr.mxu0 0.0
  %325 = vmatpush1.msra.mxu0 0.0
  %326 = vmatprep.subr.mxu0 0.0
  %327 = vmatpush1.msra.mxu0 0.0
  %328 = vmatprep.subr.mxu0 0.0
  %329 = vmatpush1.msra.mxu0 0.0
  %330 = vmatprep.subr.mxu0 0.0
  %331 = vmatpush1.msra.mxu0 0.0
  %332 = vmatprep.subr.mxu0 0.0
  %333 = vmatpush1.msra.mxu0 0.0
  %334 = vmatprep.subr.mxu0 0.0
  %335 = vmatpush1.msra.mxu0 0.0
  %336 = vmatprep.subr.mxu0 0.0
  %337 = vmatpush1.msra.mxu0 0.0
  %338 = vmatprep.subr.mxu0 0.0
  %339 = vmatpush1.msra.mxu0 0.0
  %340 = vmatprep.subr.mxu0 0.0
  %341 = vmatpush1.msra.mxu0 0.0
  %342 = vmatprep.subr.mxu0 0.0
  %343 = vmatpush1.msra.mxu0 0.0
  %344 = vmatprep.subr.mxu0 0.0
  %345 = vmatpush1.msra.mxu0 0.0
  %346 = vmatprep.subr.mxu0 0.0
  %347 = vmatpush1.msra.mxu0 0.0
  %348 = vmatprep.subr.mxu0 0.0
  %349 = vmatpush1.msra.mxu0 0.0
  %350 = vmatprep.subr.mxu0 0.0
  %351 = vmatpush1.msra.mxu0 0.0
  %352 = vmatprep.subr.mxu0 0.0
  %353 = vmatpush1.msra.mxu0 0.0
  %354 = vmatprep.subr.mxu0 0.0
  %355 = vmatpush1.msra.mxu0 0.0
  %356 = vmatprep.subr.mxu0 0.0
  %357 = vmatpush1.msra.mxu0 0.0
  %358 = vmatprep.subr.mxu0 0.0
  %359 = vmatpush1.msra.mxu0 0.0
  %360 = vmatprep.subr.mxu0 0.0
  %361 = vmatpush1.msra.mxu0 0.0
  %362 = vmatprep.subr.mxu0 0.0
  %363 = vmatpush1.msra.mxu0 0.0
  %364 = vmatprep.subr.mxu0 0.0
  %365 = vmatpush1.msra.mxu0 0.0
  %366 = vmatprep.mubr.f32.mxu0 0.0
  %367 = vmatmul.mubr.f32.gmra.mrb[0].mxu0 %v296
  %v368 = vpop.f32.mrb[0].mxu0
  %v369 = vadd.f32 %v292, %v368
  %v370 = vpop.f32.mrb[0].mxu0
  %371 = vdwg.mxu0
  %v372 = vmax.f32 %v369, 0.0
  %v373 = vld [vmem:[%s1 + $0x50] sm:$0xff]
  %v374 = vld [vmem:[%s1 + $0x58] sm:$0x3]
  %v375 = vld [vmem:[%s1 + $0x60] sm:$0xff]
  %v376 = vld [vmem:[%s1 + $0x68] sm:$0x3]
  %378 = vset.pattern.permute.xlu0 0
  %379 = vperm.xlu0 %378, %v375
  %v380 = vpop.permute.xlu0 %379
  %383 = vset.pattern.permute.xlu0 0
  %384 = vperm.xlu0 %383, %v376
  %v385 = vpop.permute.xlu0 %384
  %v388 = vsel %vm208, %v373, 0
  %v391 = vsel %vm208, %v374, 0
  %v394 = vsel %vm212, %v372, 0
  %396 = vmatprep.subr.mxu0 0.0
  %397 = vmatpush1.msra.mxu0 %v394
  %398 = vmatprep.subr.mxu0 0.0
  %399 = vmatpush1.msra.mxu0 0.0
  %400 = vmatprep.subr.mxu0 0.0
  %401 = vmatpush1.msra.mxu0 0.0
  %402 = vmatprep.subr.mxu0 0.0
  %403 = vmatpush1.msra.mxu0 0.0
  %404 = vmatprep.subr.mxu0 0.0
  %405 = vmatpush1.msra.mxu0 0.0
  %406 = vmatprep.subr.mxu0 0.0
  %407 = vmatpush1.msra.mxu0 0.0
  %408 = vmatprep.subr.mxu0 0.0
  %409 = vmatpush1.msra.mxu0 0.0
  %410 = vmatprep.subr.mxu0 0.0
  %411 = vmatpush1.msra.mxu0 0.0
  %412 = vmatprep.subr.mxu0 0.0
  %413 = vmatpush1.msra.mxu0 0.0
  %414 = vmatprep.subr.mxu0 0.0
  %415 = vmatpush1.msra.mxu0 0.0
  %416 = vmatprep.subr.mxu0 0.0
  %417 = vmatpush1.msra.mxu0 0.0
  %418 = vmatprep.subr.mxu0 0.0
  %419 = vmatpush1.msra.mxu0 0.0
  %420 = vmatprep.subr.mxu0 0.0
  %421 = vmatpush1.msra.mxu0 0.0
  %422 = vmatprep.subr.mxu0 0.0
  %423 = vmatpush1.msra.mxu0 0.0
  %424 = vmatprep.subr.mxu0 0.0
  %425 = vmatpush1.msra.mxu0 0.0
  %426 = vmatprep.subr.mxu0 0.0
  %427 = vmatpush1.msra.mxu0 0.0
  %428 = vmatprep.subr.mxu0 0.0
  %429 = vmatpush1.msra.mxu0 0.0
  %430 = vmatprep.subr.mxu0 0.0
  %431 = vmatpush1.msra.mxu0 0.0
  %432 = vmatprep.subr.mxu0 0.0
  %433 = vmatpush1.msra.mxu0 0.0
  %434 = vmatprep.subr.mxu0 0.0
  %435 = vmatpush1.msra.mxu0 0.0
  %436 = vmatprep.subr.mxu0 0.0
  %437 = vmatpush1.msra.mxu0 0.0
  %438 = vmatprep.subr.mxu0 0.0
  %439 = vmatpush1.msra.mxu0 0.0
  %440 = vmatprep.subr.mxu0 0.0
  %441 = vmatpush1.msra.mxu0 0.0
  %442 = vmatprep.subr.mxu0 0.0
  %443 = vmatpush1.msra.mxu0 0.0
  %444 = vmatprep.subr.mxu0 0.0
  %445 = vmatpush1.msra.mxu0 0.0
  %446 = vmatprep.subr.mxu0 0.0
  %447 = vmatpush1.msra.mxu0 0.0
  %448 = vmatprep.subr.mxu0 0.0
  %449 = vmatpush1.msra.mxu0 0.0
  %450 = vmatprep.subr.mxu0 0.0
  %451 = vmatpush1.msra.mxu0 0.0
  %452 = vmatprep.subr.mxu0 0.0
  %453 = vmatpush1.msra.mxu0 0.0
  %454 = vmatprep.subr.mxu0 0.0
  %455 = vmatpush1.msra.mxu0 0.0
  %456 = vmatprep.subr.mxu0 0.0
  %457 = vmatpush1.msra.mxu0 0.0
  %458 = vmatprep.subr.mxu0 0.0
  %459 = vmatpush1.msra.mxu0 0.0
  %460 = vmatprep.mubr.f32.mxu0 0.0
  %461 = vmatmul.mubr.f32.gmra.mrb[0].mxu0 %v388
  %v462 = vpop.f32.mrb[0].mxu0
  %v463 = vadd.f32 %v380, %v462
  %v464 = vpop.f32.mrb[0].mxu0
  %465 = vmatprep.mubr.f32.mxu0 0.0
  %466 = vmatmul.mubr.f32.gmra.mrb[0].mxu0 %v391
  %v467 = vpop.f32.mrb[0].mxu0
  %v468 = vadd.f32 %v385, %v467
  %v469 = vpop.f32.mrb[0].mxu0
  %470 = vdwg.mxu0
  %v471 = vmax.f32 %v463, 0.0
  %v472 = vmax.f32 %v468, 0.0
  %v473 = vld [vmem:[%s1 + $0x70] sm:$0xff]
  %v474 = vld [vmem:[%s1 + $0x78] sm:$0xff]
  %v475 = vld [vmem:[%s1 + $0x80] sm:$0xff]
  %v476 = vld [vmem:[%s1 + $0x88] sm:$0xff]
  %478 = vset.pattern.permute.xlu0 0
  %479 = vperm.xlu0 %478, %v475
  %v480 = vpop.permute.xlu0 %479
  %483 = vset.pattern.permute.xlu0 0
  %484 = vperm.xlu0 %483, %v476
  %v485 = vpop.permute.xlu0 %484
  %v488 = vsel %vm122, %v473, 0
  %v491 = vsel %vm122, %v474, 0
  %v494 = vsel %vm126, %v472, 0
  %496 = vmatprep.subr.mxu0 0.0
  %497 = vmatpush1.msra.mxu0 %v471
  %498 = vmatprep.subr.mxu0 0.0
  %499 = vmatpush1.msra.mxu0 %v494
  %500 = vmatprep.subr.mxu0 0.0
  %501 = vmatpush1.msra.mxu0 0.0
  %502 = vmatprep.subr.mxu0 0.0
  %503 = vmatpush1.msra.mxu0 0.0
  %504 = vmatprep.subr.mxu0 0.0
  %505 = vmatpush1.msra.mxu0 0.0
  %506 = vmatprep.subr.mxu0 0.0
  %507 = vmatpush1.msra.mxu0 0.0
  %508 = vmatprep.subr.mxu0 0.0
  %509 = vmatpush1.msra.mxu0 0.0
  %510 = vmatprep.subr.mxu0 0.0
  %511 = vmatpush1.msra.mxu0 0.0
  %512 = vmatprep.subr.mxu0 0.0
  %513 = vmatpush1.msra.mxu0 0.0
  %514 = vmatprep.subr.mxu0 0.0
  %515 = vmatpush1.msra.mxu0 0.0
  %516 = vmatprep.subr.mxu0 0.0
  %517 = vmatpush1.msra.mxu0 0.0
  %518 = vmatprep.subr.mxu0 0.0
  %519 = vmatpush1.msra.mxu0 0.0
  %520 = vmatprep.subr.mxu0 0.0
  %521 = vmatpush1.msra.mxu0 0.0
  %522 = vmatprep.subr.mxu0 0.0
  %523 = vmatpush1.msra.mxu0 0.0
  %524 = vmatprep.subr.mxu0 0.0
  %525 = vmatpush1.msra.mxu0 0.0
  %526 = vmatprep.subr.mxu0 0.0
  %527 = vmatpush1.msra.mxu0 0.0
  %528 = vmatprep.subr.mxu0 0.0
  %529 = vmatpush1.msra.mxu0 0.0
  %530 = vmatprep.subr.mxu0 0.0
  %531 = vmatpush1.msra.mxu0 0.0
  %532 = vmatprep.subr.mxu0 0.0
  %533 = vmatpush1.msra.mxu0 0.0
  %534 = vmatprep.subr.mxu0 0.0
  %535 = vmatpush1.msra.mxu0 0.0
  %536 = vmatprep.subr.mxu0 0.0
  %537 = vmatpush1.msra.mxu0 0.0
  %538 = vmatprep.subr.mxu0 0.0
  %539 = vmatpush1.msra.mxu0 0.0
  %540 = vmatprep.subr.mxu0 0.0
  %541 = vmatpush1.msra.mxu0 0.0
  %542 = vmatprep.subr.mxu0 0.0
  %543 = vmatpush1.msra.mxu0 0.0
  %544 = vmatprep.subr.mxu0 0.0
  %545 = vmatpush1.msra.mxu0 0.0
  %546 = vmatprep.subr.mxu0 0.0
  %547 = vmatpush1.msra.mxu0 0.0
  %548 = vmatprep.subr.mxu0 0.0
  %549 = vmatpush1.msra.mxu0 0.0
  %550 = vmatprep.subr.mxu0 0.0
  %551 = vmatpush1.msra.mxu0 0.0
  %552 = vmatprep.subr.mxu0 0.0
  %553 = vmatpush1.msra.mxu0 0.0
  %554 = vmatprep.subr.mxu0 0.0
  %555 = vmatpush1.msra.mxu0 0.0
  %556 = vmatprep.subr.mxu0 0.0
  %557 = vmatpush1.msra.mxu0 0.0
  %558 = vmatprep.subr.mxu0 0.0
  %559 = vmatpush1.msra.mxu0 0.0
  %560 = vmatprep.mubr.f32.mxu0 0.0
  %561 = vmatmul.mubr.f32.gmra.mrb[0].mxu0 %v488
  %v562 = vpop.f32.mrb[0].mxu0
  %v563 = vadd.f32 %v480, %v562
  %v564 = vpop.f32.mrb[0].mxu0
  %565 = vmatprep.mubr.f32.mxu0 0.0
  %566 = vmatmul.mubr.f32.gmra.mrb[0].mxu0 %v491
  %v567 = vpop.f32.mrb[0].mxu0
  %v568 = vadd.f32 %v485, %v567
  %v569 = vpop.f32.mrb[0].mxu0
  %570 = vdwg.mxu0
  %571 = vst [vmem:[%s3] sm:$0xff] %v563
  %572 = vst [vmem:[%s3 + $0x8] sm:$0xff] %v568
  %v573 = vsub.f32 %v15, %v563
  %v574 = vsub.f32 %v16, %v568
  %v575 = vmul.f32 %v573, %v573
  %v576 = vmul.f32 %v574, %v574
  %v577 = vadd.f32 %v575, %v576
  %v578 = vrot.slane %v577, 4
  %v579 = vadd.f32 %v577, %v578
  %v580 = vrot.slane %v579, 2
  %v581 = vadd.f32 %v579, %v580
  %v582 = vrot.slane %v581, 1
  %v583 = vadd.f32 %v581, %v582
  %v584 = vrcp.pop 16.0
  %v585 = vmul.f32 %v583, %v584
  %586 = vst [vmem:[%s4] sm:$0x1] %v585
  %v587 = vld [vmem:[%s1 + $0x90] sm:$0xff]
  %v588 = vld [vmem:[%s1 + $0x98] sm:$0x3]
  %590 = vset.pattern.permute.xlu0 4
  %591 = vperm.xlu0 %590, %v587
  %v592 = vpop.permute.xlu0 %591
  %595 = vset.pattern.permute.xlu0 4
  %596 = vperm.xlu0 %595, %v588
  %v597 = vpop.permute.xlu0 %596
  %v599 = vmul.f32 %v592, %v585
  %v600 = vmul.f32 %v597, %v585
  %v601 = vsel %vm294, %v587, 0
  %v603 = vsel %vm294, %v588, 0
  %605 = vmatprep.subr.mxu0 0.0
  %606 = vmatpush1.msra.mxu0 %v300
  %607 = vmatprep.subr.mxu0 0.0
  %608 = vmatpush1.msra.mxu0 0.0
  %609 = vmatprep.subr.mxu0 0.0
  %610 = vmatpush1.msra.mxu0 0.0
  %611 = vmatprep.subr.mxu0 0.0
  %612 = vmatpush1.msra.mxu0 0.0
  %613 = vmatprep.subr.mxu0 0.0
  %614 = vmatpush1.msra.mxu0 0.0
  %615 = vmatprep.subr.mxu0 0.0
  %616 = vmatpush1.msra.mxu0 0.0
  %617 = vmatprep.subr.mxu0 0.0
  %618 = vmatpush1.msra.mxu0 0.0
  %619 = vmatprep.subr.mxu0 0.0
  %620 = vmatpush1.msra.mxu0 0.0
  %621 = vmatprep.subr.mxu0 0.0
  %622 = vmatpush1.msra.mxu0 0.0
  %623 = vmatprep.subr.mxu0 0.0
  %624 = vmatpush1.msra.mxu0 0.0
  %625 = vmatprep.subr.mxu0 0.0
  %626 = vmatpush1.msra.mxu0 0.0
  %627 = vmatprep.subr.mxu0 0.0
  %628 = vmatpush1.msra.mxu0 0.0
  %629 = vmatprep.subr.mxu0 0.0
  %630 = vmatpush1.msra.mxu0 0.0
  %631 = vmatprep.subr.mxu0 0.0
  %632 = vmatpush1.msra.mxu0 0.0
  %633 = vmatprep.subr.mxu0 0.0
  %634 = vmatpush1.msra.mxu0 0.0
  %635 = vmatprep.subr.mxu0 0.0
  %636 = vmatpush1.msra.mxu0 0.0
  %637 = vmatprep.subr.mxu0 0.0
  %638 = vmatpush1.msra.mxu0 0.0
  %639 = vmatprep.subr.mxu0 0.0
  %640 = vmatpush1.msra.mxu0 0.0
  %641 = vmatprep.subr.mxu0 0.0
  %642 = vmatpush1.msra.mxu0 0.0
  %643 = vmatprep.subr.mxu0 0.0
  %644 = vmatpush1.msra.mxu0 0.0
  %645 = vmatprep.subr.mxu0 0.0
  %646 = vmatpush1.msra.mxu0 0.0
  %647 = vmatprep.subr.mxu0 0.0
  %648 = vmatpush1.msra.mxu0 0.0
  %649 = vmatprep.subr.mxu0 0.0
  %650 = vmatpush1.msra.mxu0 0.0
  %651 = vmatprep.subr.mxu0 0.0
  %652 = vmatpush1.msra.mxu0 0.0
  %653 = vmatprep.subr.mxu0 0.0
  %654 = vmatpush1.msra.mxu0 0.0
  %655 = vmatprep.subr.mxu0 0.0
  %656 = vmatpush1.msra.mxu0 0.0
  %657 = vmatprep.subr.mxu0 0.0
  %658 = vmatpush1.msra.mxu0 0.0
  %659 = vmatprep.subr.mxu0 0.0
  %660 = vmatpush1.msra.mxu0 0.0
  %661 = vmatprep.subr.mxu0 0.0
  %662 = vmatpush1.msra.mxu0 0.0
  %663 = vmatprep.subr.mxu0 0.0
  %664 = vmatpush1.msra.mxu0 0.0
  %665 = vmatprep.subr.mxu0 0.0
  %666 = vmatpush1.msra.mxu0 0.0
  %667 = vmatprep.subr.mxu0 0.0
  %668 = vmatpush1.msra.mxu0 0.0
  %669 = vmatprep.mubr.f32.mxu0 0.0
  %670 = vmatmul.mubr.f32.gmra.mrb[0].mxu0 %v601
  %v671 = vpop.f32.mrb[0].mxu0
  %v672 = vadd.f32 %v599, %v671
  %v673 = vpop.f32.mrb[0].mxu0
  %674 = vmatprep.mubr.f32.mxu0 0.0
  %675 = vmatmul.mubr.f32.gmra.mrb[0].mxu0 %v603
  %v676 = vpop.f32.mrb[0].mxu0
  %v677 = vadd.f32 %v600, %v676
  %v678 = vpop.f32.mrb[0].mxu0
  %679 = vdwg.mxu0
  %v680 = vld [vmem:[%s1 + $0xa0] sm:$0xff]
  %v681 = vld [vmem:[%s1 + $0xa8] sm:$0x3]
  %683 = vset.pattern.permute.xlu0 0
  %684 = vperm.xlu0 %683, %v680
  %v685 = vpop.permute.xlu0 %684
  %688 = vset.pattern.permute.xlu0 0
  %689 = vperm.xlu0 %688, %v681
  %v690 = vpop.permute.xlu0 %689
  %v692 = vadd.f32 %v672, %v685
  %v693 = vadd.f32 %v677, %v690
  %v694 = vtanh.pop %v692
  %v695 = vtanh.pop %v693
  %v696 = vld [vmem:[%s1 + $0xb0] sm:$0x3]
  %v697 = vld [vmem:[%s1 + $0xb8] sm:$0x3]
  %699 = vset.pattern.permute.xlu0 0
  %700 = vperm.xlu0 %699, %v697
  %v701 = vpop.permute.xlu0 %700
  %v704 = vsel %vm122, %v696, 0
  %v707 = vsel %vm126, %v695, 0
  %709 = vmatprep.subr.mxu0 0.0
  %710 = vmatpush1.msra.mxu0 %v694
  %711 = vmatprep.subr.mxu0 0.0
  %712 = vmatpush1.msra.mxu0 %v707
  %713 = vmatprep.subr.mxu0 0.0
  %714 = vmatpush1.msra.mxu0 0.0
  %715 = vmatprep.subr.mxu0 0.0
  %716 = vmatpush1.msra.mxu0 0.0
  %717 = vmatprep.subr.mxu0 0.0
  %718 = vmatpush1.msra.mxu0 0.0
  %719 = vmatprep.subr.mxu0 0.0
  %720 = vmatpush1.msra.mxu0 0.0
  %721 = vmatprep.subr.mxu0 0.0
  %722 = vmatpush1.msra.mxu0 0.0
  %723 = vmatprep.subr.mxu0 0.0
  %724 = vmatpush1.msra.mxu0 0.0
  %725 = vmatprep.subr.mxu0 0.0
  %726 = vmatpush1.msra.mxu0 0.0
  %727 = vmatprep.subr.mxu0 0.0
  %728 = vmatpush1.msra.mxu0 0.0
  %729 = vmatprep.subr.mxu0 0.0
  %730 = vmatpush1.msra.mxu0 0.0
  %731 = vmatprep.subr.mxu0 0.0
  %732 = vmatpush1.msra.mxu0 0.0
  %733 = vmatprep.subr.mxu0 0.0
  %734 = vmatpush1.msra.mxu0 0.0
  %735 = vmatprep.subr.mxu0 0.0
  %736 = vmatpush1.msra.mxu0 0.0
  %737 = vmatprep.subr.mxu0 0.0
  %738 = vmatpush1.msra.mxu0 0.0
  %739 = vmatprep.subr.mxu0 0.0
  %740 = vmatpush1.msra.mxu0 0.0
  %741 = vmatprep.subr.mxu0 0.0
  %742 = vmatpush1.msra.mxu0 0.0
  %743 = vmatprep.subr.mxu0 0.0
  %744 = vmatpush1.msra.mxu0 0.0
  %745 = vmatprep.subr.mxu0 0.0
  %746 = vmatpush1.msra.mxu0 0.0
  %747 = vmatprep.subr.mxu0 0.0
  %748 = vmatpush1.msra.mxu0 0.0
  %749 = vmatprep.subr.mxu0 0.0
  %750 = vmatpush1.msra.mxu0 0.0
  %751 = vmatprep.subr.mxu0 0.0
  %752 = vmatpush1.msra.mxu0 0.0
  %753 = vmatprep.subr.mxu0 0.0
  %754 = vmatpush1.msra.mxu0 0.0
  %755 = vmatprep.subr.mxu0 0.0
  %756 = vmatpush1.msra.mxu0 0.0
  %757 = vmatprep.subr.mxu0 0.0
  %758 = vmatpush1.msra.mxu0 0.0
  %759 = vmatprep.subr.mxu0 0.0
  %760 = vmatpush1.msra.mxu0 0.0
  %761 = vmatprep.subr.mxu0 0.0
  %762 = vmatpush1.msra.mxu0 0.0
  %763 = vmatprep.subr.mxu0 0.0
  %764 = vmatpush1.msra.mxu0 0.0
  %765 = vmatprep.subr.mxu0 0.0
  %766 = vmatpush1.msra.mxu0 0.0
  %767 = vmatprep.subr.mxu0 0.0
  %768 = vmatpush1.msra.mxu0 0.0
  %769 = vmatprep.subr.mxu0 0.0
  %770 = vmatpush1.msra.mxu0 0.0
  %771 = vmatprep.subr.mxu0 0.0
  %772 = vmatpush1.msra.mxu0 0.0
  %773 = vmatprep.mubr.f32.mxu0 0.0
  %774 = vmatmul.mubr.f32.gmra.mrb[0].mxu0 %v704
  %v775 = vpop.f32.mrb[0].mxu0
  %v776 = vadd.f32 %v701, %v775
  %v777 = vpop.f32.mrb[0].mxu0
  %778 = vdwg.mxu0
  %v780 = vrot.slane %v776, 1
  %v782 = vmax.f32 %v776, %v780
  %v783 = vsub.f32 %v776, %v782
  %v784 = vmul.f32 %v783, 1.442695
  %v785 = vpow.pop %v784
  %v787 = vrot.slane %v782, 7
  %v789 = vsub.f32 %v776, %v787
  %v790 = vmul.f32 %v789, 1.442695
  %v791 = vpow.pop %v790
  %v793 = vrot.slane %v791, 1
  %v795 = vadd.f32 %v785, %v793
  %v796 = vrcp.pop %v795
  %v797 = vmul.f32 1.0, %v796
  %v798 = vmul.f32 %v785, %v797
  %v800 = vrot.slane %v797, 7
  %v802 = vmul.f32 %v791, %v800
  %vm803 = vcmask 1040384
  %v804 = vsel %vm803, %v798, %v802
  %805 = vst [vmem:[%s5] sm:$0x3] %v804
  // Predicated region
  $region10: #{dagmm_forward.1} parent=0 // pred_check
    _
  $region11: #{dagmm_forward.1} parent=0 // pred_check_branch
    %807 = sbr.rel (0) target = $region13
  $region12: #{dagmm_forward.1} parent=0 // pred_region
    _
  $region13: #{dagmm_forward.1} parent=0 // pred_fallthru
    _
  // Predicated region
  $region14: #{dagmm_forward.1} parent=0 // pred_check
    _
  $region15: #{dagmm_forward.1} parent=0 // pred_check_branch
    %809 = sbr.rel (0) target = $region17
  $region16: #{dagmm_forward.1} parent=0 // pred_region
    _
  $region17: #{dagmm_forward.1} parent=0 // pred_fallthru
    _
  // Predicated region
  $region18: #{dagmm_forward.1} parent=0 // pred_check
    _
  $region19: #{dagmm_forward.1} parent=0 // pred_check_branch
    %811 = sbr.rel (0) target = $region21
  $region20: #{dagmm_forward.1} parent=0 // pred_region
    _
  $region21: #{dagmm_forward.1} parent=0 // pred_fallthru
    _
  // Predicated region
  $region22: #{dagmm_forward.1} parent=0 // pred_check
    _
  $region23: #{dagmm_forward.1} parent=0 // pred_check_branch
    %813 = sbr.rel (0) target = $region25
  $region24: #{dagmm_forward.1} parent=0 // pred_region
    _
  $region25: #{dagmm_forward.1} parent=0 // pred_fallthru
    _
  // Predicated region
  $region26: #{dagmm_forward.1} parent=0 // pred_check
    _
  $region27: #{dagmm_forward.1} parent=0 // pred_check_branch
    %815 = sbr.rel (0) target = $region29
  $region28: #{dagmm_forward.1} parent=0 // pred_region
    _
  $region29: #{dagmm_forward.1} parent=0 // pred_fallthru
    _
  // Predicated region
  $region30: #{dagmm_forward.1} parent=0 // pred_check
    _
  $region31: #{dagmm_forward.1} parent=0 // pred_check_branch
    %817 = sbr.rel (0) target = $region33
  $region32: #{dagmm_forward.1} parent=0 // pred_region
    _
  $region33: #{dagmm_forward.1} parent=0 // pred_fallthru
    _
  // Predicated region
  $region34: #{dagmm_forward.1} parent=0 // pred_check
    _
  $region35: #{dagmm_forward.1} parent=0 // pred_check_branch
    %819 = sbr.rel (0) target = $region37
  $region36: #{dagmm_forward.1} parent=0 // pred_region
    _
  $region37: #{dagmm_forward.1} parent=0 // pred_fallthru
    _
  // Predicated region
  $region38: #{dagmm_forward.1} parent=0 // pred_check
    _
  $region39: #{dagmm_forward.1} parent=0 // pred_check_branch
    %821 = sbr.rel (0) target = $region41
  $region40: #{dagmm_forward.1} parent=0 // pred_region
    _
  $region41: #{dagmm_forward.1} parent=0 // pred_fallthru
    _

</llo_original>
